<compile_context>
chip_gen: v6e
topology: v6e:2x2x1
jax: 0.10.0
libtpu: 0.0.40
codegen_flags: <defaults>
</compile_context>

<pallas_src>
import functools

import jax
import jax.numpy as jnp
from jax.experimental import pallas as pl
from jax.experimental.pallas import tpu as pltpu

HIDDEN = 128
LANE = 128


def _round_up(n, m):
    return ((n + m - 1) // m) * m


def _policy_kernel(x_ref, w1_ref, b1_ref, w2_ref, b2_ref, w3_ref, b3_ref,
                   o_ref, xpad_ref, *, state_dim, action_dim):
    # Lane-pad x inside VMEM (no HBM round trip).  Zero the scratch every step
    # (cheap; a handful of vregs) so this stays correct when the parallel grid
    # axis is sharded across TensorCores (each core has its own scratch).
    xpad_ref[...] = jnp.zeros_like(xpad_ref)
    xpad_ref[:, :state_dim] = x_ref[...]

    x = xpad_ref[...].astype(jnp.bfloat16)                           # (B, Kpad)

    # fc1 + relu  (bf16 MXU, f32 accumulate)
    h1 = jnp.dot(x, w1_ref[...], preferred_element_type=jnp.float32)
    h1 = jnp.maximum(h1 + b1_ref[...], 0.0)                          # (B, 128)

    # fc2 + relu
    h2 = jnp.dot(h1.astype(jnp.bfloat16), w2_ref[...],
                 preferred_element_type=jnp.float32)
    h2 = jnp.maximum(h2 + b2_ref[...], 0.0)                          # (B, 128)

    # fc3
    logits = jnp.dot(h2.astype(jnp.bfloat16), w3_ref[...],
                     preferred_element_type=jnp.float32)
    logits = logits + b3_ref[...]                                    # (B, Apad)

    # mask padded action columns, then softmax over last dim (all f32)
    col = jax.lax.broadcasted_iota(jnp.int32, logits.shape, 1)
    logits = jnp.where(col < action_dim, logits, -jnp.inf)
    m = jnp.max(logits, axis=-1, keepdims=True)
    e = jnp.exp(logits - m)
    s = jnp.sum(e, axis=-1, keepdims=True)
    o_ref[...] = e * pl.reciprocal(s, approx=True)


def prepare_params(params, state_dim, action_dim):
    """One-time parameter prep: pad to TPU-friendly shapes and cast to bf16.

    params: dict of fc{1,2,3} with w stored (in_features, out_features)."""
    kpad = _round_up(state_dim, LANE)
    apad = _round_up(action_dim, LANE)

    w1 = jnp.zeros((kpad, HIDDEN), jnp.bfloat16).at[:state_dim, :].set(
        params["fc1"]["w"].astype(jnp.bfloat16))
    b1 = params["fc1"]["b"].astype(jnp.float32).reshape(1, HIDDEN)
    w2 = params["fc2"]["w"].astype(jnp.bfloat16)
    b2 = params["fc2"]["b"].astype(jnp.float32).reshape(1, HIDDEN)
    w3 = jnp.zeros((HIDDEN, apad), jnp.bfloat16).at[:, :action_dim].set(
        params["fc3"]["w"].astype(jnp.bfloat16))
    b3 = jnp.zeros((1, apad), jnp.float32).at[0, :action_dim].set(
        params["fc3"]["b"].astype(jnp.float32))
    return (w1, b1, w2, b2, w3, b3)


@functools.partial(jax.jit, static_argnums=(2, 3))
def policy_network_forward(x, prepared, state_dim, action_dim):
    """x: (batch, state_dim) float32. prepared: output of prepare_params."""
    batch = x.shape[0]
    w1, b1, w2, b2, w3, b3 = prepared
    kpad = w1.shape[0]
    apad = w3.shape[1]

    # Batch tile: up to 256 rows (good MXU occupancy on v6e/v7x, safe on v5e).
    tile_b = min(256, _round_up(batch, 8))
    bpad = _round_up(batch, tile_b)
    if bpad != batch:
        x = jnp.pad(x, ((0, bpad - batch), (0, 0)))   # batch-only pad, no lane pad

    kernel = functools.partial(_policy_kernel,
                               state_dim=state_dim, action_dim=action_dim)

    out = pl.pallas_call(
        kernel,
        out_shape=jax.ShapeDtypeStruct((bpad, apad), jnp.float32),
        grid=(bpad // tile_b,),
        in_specs=[
            pl.BlockSpec((tile_b, state_dim), lambda i: (i, 0)),   # x tile
            pl.BlockSpec((kpad, HIDDEN), lambda i: (0, 0)),        # w1 (resident)
            pl.BlockSpec((1, HIDDEN), lambda i: (0, 0)),           # b1
            pl.BlockSpec((HIDDEN, HIDDEN), lambda i: (0, 0)),      # w2
            pl.BlockSpec((1, HIDDEN), lambda i: (0, 0)),           # b2
            pl.BlockSpec((HIDDEN, apad), lambda i: (0, 0)),        # w3
            pl.BlockSpec((1, apad), lambda i: (0, 0)),             # b3
        ],
        out_specs=pl.BlockSpec((tile_b, apad), lambda i: (i, 0)),
        scratch_shapes=[pltpu.VMEM((tile_b, kpad), jnp.float32)],  # lane-padded x
        compiler_params=pltpu.CompilerParams(
            dimension_semantics=("parallel",)),
    )(x, w1, b1, w2, b2, w3, b3)

    return out[:batch, :action_dim]


def init_params(key, state_dim, action_dim):
    """Deterministic init (PyTorch-style uniform); w stored (in, out)."""
    ks = jax.random.split(key, 6)

    def linear(kw, kb, fan_in, fan_out):
        bound = 1.0 / jnp.sqrt(jnp.float32(fan_in))
        w = jax.random.uniform(kw, (fan_in, fan_out), jnp.float32, -bound, bound)
        b = jax.random.uniform(kb, (fan_out,), jnp.float32, -bound, bound)
        return {"w": w, "b": b}

    return {
        "fc1": linear(ks[0], ks[1], state_dim, HIDDEN),
        "fc2": linear(ks[2], ks[3], HIDDEN, HIDDEN),
        "fc3": linear(ks[4], ks[5], HIDDEN, action_dim),
    }


def _reference_f32(x, params):
    h = jnp.maximum(x @ params["fc1"]["w"] + params["fc1"]["b"], 0.0)
    h = jnp.maximum(h @ params["fc2"]["w"] + params["fc2"]["b"], 0.0)
    return jax.nn.softmax(h @ params["fc3"]["w"] + params["fc3"]["b"], axis=-1)


def _reference_bf16(x, params):
    def mm(a, w):
        return jnp.dot(a.astype(jnp.bfloat16), w.astype(jnp.bfloat16),
                       preferred_element_type=jnp.float32)
    h = jnp.maximum(mm(x, params["fc1"]["w"]) + params["fc1"]["b"], 0.0)
    h = jnp.maximum(mm(h, params["fc2"]["w"]) + params["fc2"]["b"], 0.0)
    return jax.nn.softmax(mm(h, params["fc3"]["w"]) + params["fc3"]["b"], axis=-1)


if __name__ == "__main__":
    key = jax.random.PRNGKey(0)
    k_params, k_x, k_x2 = jax.random.split(key, 3)

    state_dim, action_dim = 4, 2      # CartPole-like policy head
    batch = 8

    params = init_params(k_params, state_dim, action_dim)
    prepared = prepare_params(params, state_dim, action_dim)   # padded once

    x = jax.random.normal(k_x, (batch, state_dim), jnp.float32)
    probs = policy_network_forward(x, prepared, state_dim, action_dim)
    probs = jax.block_until_ready(probs)

    ref16 = _reference_bf16(x, params)
    ref32 = _reference_f32(x, params)
    assert probs.shape == (batch, action_dim)
    assert jnp.allclose(probs, ref16, atol=1e-2, rtol=1e-2)
    assert jnp.allclose(probs, ref32, atol=5e-2, rtol=5e-2)
    assert jnp.allclose(jnp.sum(probs, axis=-1), 1.0, atol=1e-2)

    # Larger batch exercises the parallel batch grid with 256-row tiles
    # (+ ragged-batch padding path).
    x2 = jax.random.normal(k_x2, (300, state_dim), jnp.float32)
    probs2 = jax.block_until_ready(
        policy_network_forward(x2, prepared, state_dim, action_dim))
    assert probs2.shape == (300, action_dim)
    assert jnp.allclose(probs2, _reference_bf16(x2, params), atol=1e-2, rtol=1e-2)

    print("KERNEL_OK")
</pallas_src>

<mosaic_0001>
module attributes {stable_mosaic.version = 11 : i64} {
  func.func @_policy_kernel(%arg0: i32, %arg1: memref<8x4xf32, #tpu.memory_space<vmem>>, %arg2: memref<128x128xbf16, #tpu.memory_space<vmem>>, %arg3: memref<1x128xf32, #tpu.memory_space<vmem>>, %arg4: memref<128x128xbf16, #tpu.memory_space<vmem>>, %arg5: memref<1x128xf32, #tpu.memory_space<vmem>>, %arg6: memref<128x128xbf16, #tpu.memory_space<vmem>>, %arg7: memref<1x128xf32, #tpu.memory_space<vmem>>, %arg8: memref<8x128xf32, #tpu.memory_space<vmem>>, %arg9: memref<8x128xf32, #tpu.memory_space<vmem>>) attributes {dimension_semantics = [#tpu.dimension_semantics<parallel>], iteration_bounds = array<i64: 1>, scalar_prefetch = 0 : i64, scratch_operands = 1 : i64, tpu.core_type = #tpu.core_type<tc>, window_params = [{transform_indices = @transform_0, window_bounds = array<i64: 8, 4>}, {pipeline_mode = #tpu.pipeline_mode<synchronous>, transform_indices = @transform_1, window_bounds = array<i64: 128, 128>}, {pipeline_mode = #tpu.pipeline_mode<synchronous>, transform_indices = @transform_2, window_bounds = array<i64: 1, 128>}, {pipeline_mode = #tpu.pipeline_mode<synchronous>, transform_indices = @transform_3, window_bounds = array<i64: 128, 128>}, {pipeline_mode = #tpu.pipeline_mode<synchronous>, transform_indices = @transform_4, window_bounds = array<i64: 1, 128>}, {pipeline_mode = #tpu.pipeline_mode<synchronous>, transform_indices = @transform_5, window_bounds = array<i64: 128, 128>}, {pipeline_mode = #tpu.pipeline_mode<synchronous>, transform_indices = @transform_6, window_bounds = array<i64: 1, 128>}, {transform_indices = @transform_7, window_bounds = array<i64: 8, 128>}]} {
    %cst = arith.constant 0.000000e+00 : f32
    %0 = vector.broadcast %cst : f32 to vector<8x128xf32>
    %c0 = arith.constant 0 : index
    %c0_0 = arith.constant 0 : index
    %1 = vector.load %arg9[%c0, %c0_0] : memref<8x128xf32, #tpu.memory_space<vmem>>, vector<8x128xf32>
    tpu.vector_store %arg9[%c0, %c0_0], %0 {strides = array<i32>} : memref<8x128xf32, #tpu.memory_space<vmem>>, vector<8x128xf32>,
    %c0_1 = arith.constant 0 : index
    %c0_2 = arith.constant 0 : index
    %2 = vector.load %arg1[%c0_1, %c0_2] : memref<8x4xf32, #tpu.memory_space<vmem>>, vector<8x4xf32>
    %c0_3 = arith.constant 0 : index
    %c0_4 = arith.constant 0 : index
    %3 = vector.load %arg9[%c0_3, %c0_4] : memref<8x128xf32, #tpu.memory_space<vmem>>, vector<8x4xf32>
    tpu.vector_store %arg9[%c0_3, %c0_4], %2 {strides = array<i32>} : memref<8x128xf32, #tpu.memory_space<vmem>>, vector<8x4xf32>,
    %c0_5 = arith.constant 0 : index
    %c0_6 = arith.constant 0 : index
    %4 = vector.load %arg9[%c0_5, %c0_6] : memref<8x128xf32, #tpu.memory_space<vmem>>, vector<8x128xf32>
    %5 = arith.truncf %4 : vector<8x128xf32> to vector<8x128xbf16>
    %c0_7 = arith.constant 0 : index
    %c0_8 = arith.constant 0 : index
    %6 = vector.load %arg2[%c0_7, %c0_8] : memref<128x128xbf16, #tpu.memory_space<vmem>>, vector<128x128xbf16>
    %cst_9 = arith.constant dense<0.000000e+00> : vector<8x128xf32>
    %7 = tpu.matmul %5, %6, %cst_9 {dimension_numbers = #tpu.dot_dimension_numbers<[1], [0], [0], [1], [0, 0, 1, 1], [], []>} : vector<8x128xbf16>, vector<128x128xbf16>, vector<8x128xf32> -> vector<8x128xf32>
    %c0_10 = arith.constant 0 : index
    %c0_11 = arith.constant 0 : index
    %8 = vector.load %arg3[%c0_10, %c0_11] : memref<1x128xf32, #tpu.memory_space<vmem>>, vector<1x128xf32>
    %9 = vector.broadcast %8 : vector<1x128xf32> to vector<8x128xf32>
    %10 = arith.addf %7, %9 : vector<8x128xf32>
    %cst_12 = arith.constant 0.000000e+00 : f32
    %11 = vector.broadcast %cst_12 : f32 to vector<8x128xf32>
    %12 = arith.maximumf %10, %11 : vector<8x128xf32>
    %13 = arith.truncf %12 : vector<8x128xf32> to vector<8x128xbf16>
    %c0_13 = arith.constant 0 : index
    %c0_14 = arith.constant 0 : index
    %14 = vector.load %arg4[%c0_13, %c0_14] : memref<128x128xbf16, #tpu.memory_space<vmem>>, vector<128x128xbf16>
    %cst_15 = arith.constant dense<0.000000e+00> : vector<8x128xf32>
    %15 = tpu.matmul %13, %14, %cst_15 {dimension_numbers = #tpu.dot_dimension_numbers<[1], [0], [0], [1], [0, 0, 1, 1], [], []>} : vector<8x128xbf16>, vector<128x128xbf16>, vector<8x128xf32> -> vector<8x128xf32>
    %c0_16 = arith.constant 0 : index
    %c0_17 = arith.constant 0 : index
    %16 = vector.load %arg5[%c0_16, %c0_17] : memref<1x128xf32, #tpu.memory_space<vmem>>, vector<1x128xf32>
    %17 = vector.broadcast %16 : vector<1x128xf32> to vector<8x128xf32>
    %18 = arith.addf %15, %17 : vector<8x128xf32>
    %cst_18 = arith.constant 0.000000e+00 : f32
    %19 = vector.broadcast %cst_18 : f32 to vector<8x128xf32>
    %20 = arith.maximumf %18, %19 : vector<8x128xf32>
    %21 = arith.truncf %20 : vector<8x128xf32> to vector<8x128xbf16>
    %c0_19 = arith.constant 0 : index
    %c0_20 = arith.constant 0 : index
    %22 = vector.load %arg6[%c0_19, %c0_20] : memref<128x128xbf16, #tpu.memory_space<vmem>>, vector<128x128xbf16>
    %cst_21 = arith.constant dense<0.000000e+00> : vector<8x128xf32>
    %23 = tpu.matmul %21, %22, %cst_21 {dimension_numbers = #tpu.dot_dimension_numbers<[1], [0], [0], [1], [0, 0, 1, 1], [], []>} : vector<8x128xbf16>, vector<128x128xbf16>, vector<8x128xf32> -> vector<8x128xf32>
    %c0_22 = arith.constant 0 : index
    %c0_23 = arith.constant 0 : index
    %24 = vector.load %arg7[%c0_22, %c0_23] : memref<1x128xf32, #tpu.memory_space<vmem>>, vector<1x128xf32>
    %25 = vector.broadcast %24 : vector<1x128xf32> to vector<8x128xf32>
    %26 = arith.addf %23, %25 : vector<8x128xf32>
    %27 = tpu.iota {dimensions = array<i32: 1>} : vector<8x128xi32>
    %c2_i32 = arith.constant 2 : i32
    %28 = vector.broadcast %c2_i32 : i32 to vector<8x128xi32>
    %29 = arith.cmpi slt, %27, %28 : vector<8x128xi32>
    %cst_24 = arith.constant 0xFF800000 : f32
    %30 = vector.broadcast %cst_24 : f32 to vector<8x128xf32>
    %31 = arith.select %29, %26, %30 : vector<8x128xi1>, vector<8x128xf32>
    %cst_25 = arith.constant dense<0xFF800000> : vector<8xf32>
    %32 = vector.multi_reduction <maximumf>, %31, %cst_25 [1] : vector<8x128xf32> to vector<8xf32>
    %33 = vector.shape_cast %32 : vector<8xf32> to vector<8x1xf32>
    %34 = vector.broadcast %33 : vector<8x1xf32> to vector<8x128xf32>
    %35 = arith.subf %31, %34 : vector<8x128xf32>
    %36 = math.exp %35 : vector<8x128xf32>
    %cst_26 = arith.constant dense<0.000000e+00> : vector<8xf32>
    %37 = vector.multi_reduction <add>, %36, %cst_26 [1] : vector<8x128xf32> to vector<8xf32>
    %38 = vector.shape_cast %37 : vector<8xf32> to vector<8x1xf32>
    %39 = tpu.reciprocal %38 {approx = true} : vector<8x1xf32> -> vector<8x1xf32>
    %40 = vector.broadcast %39 : vector<8x1xf32> to vector<8x128xf32>
    %41 = arith.mulf %36, %40 : vector<8x128xf32>
    %c0_27 = arith.constant 0 : index
    %c0_28 = arith.constant 0 : index
    %42 = vector.load %arg8[%c0_27, %c0_28] : memref<8x128xf32, #tpu.memory_space<vmem>>, vector<8x128xf32>
    tpu.vector_store %arg8[%c0_27, %c0_28], %41 {strides = array<i32>} : memref<8x128xf32, #tpu.memory_space<vmem>>, vector<8x128xf32>,
    return
  }
  func.func @transform_0(%arg0: i32) -> (i32, i32) {
    %c0_i32 = arith.constant 0 : i32
    %c0_i32_0 = arith.constant 0 : i32
    return %arg0, %c0_i32 : i32, i32
  }
  func.func @transform_1(%arg0: i32) -> (i32, i32) {
    %c0_i32 = arith.constant 0 : i32
    %c0_i32_0 = arith.constant 0 : i32
    %c0_i32_1 = arith.constant 0 : i32
    return %c0_i32, %c0_i32_0 : i32, i32
  }
  func.func @transform_2(%arg0: i32) -> (i32, i32) {
    %c0_i32 = arith.constant 0 : i32
    %c0_i32_0 = arith.constant 0 : i32
    %c0_i32_1 = arith.constant 0 : i32
    return %c0_i32, %c0_i32_0 : i32, i32
  }
  func.func @transform_3(%arg0: i32) -> (i32, i32) {
    %c0_i32 = arith.constant 0 : i32
    %c0_i32_0 = arith.constant 0 : i32
    %c0_i32_1 = arith.constant 0 : i32
    return %c0_i32, %c0_i32_0 : i32, i32
  }
  func.func @transform_4(%arg0: i32) -> (i32, i32) {
    %c0_i32 = arith.constant 0 : i32
    %c0_i32_0 = arith.constant 0 : i32
    %c0_i32_1 = arith.constant 0 : i32
    return %c0_i32, %c0_i32_0 : i32, i32
  }
  func.func @transform_5(%arg0: i32) -> (i32, i32) {
    %c0_i32 = arith.constant 0 : i32
    %c0_i32_0 = arith.constant 0 : i32
    %c0_i32_1 = arith.constant 0 : i32
    return %c0_i32, %c0_i32_0 : i32, i32
  }
  func.func @transform_6(%arg0: i32) -> (i32, i32) {
    %c0_i32 = arith.constant 0 : i32
    %c0_i32_0 = arith.constant 0 : i32
    %c0_i32_1 = arith.constant 0 : i32
    return %c0_i32, %c0_i32_0 : i32, i32
  }
  func.func @transform_7(%arg0: i32) -> (i32, i32) {
    %c0_i32 = arith.constant 0 : i32
    %c0_i32_0 = arith.constant 0 : i32
    return %arg0, %c0_i32 : i32, i32
  }
}

</mosaic_0001>

<llo_original>
// kernel: policy_network_forward.1
$region0: #{policy_network_forward.1}
  #allocation0 [shape = 'u32[]', space=smem, size = 0x4, offset = 0x4, fixed_abs, tag = 'smem constant byte address 0x4 - core index']
  #allocation1 [shape = 'u32[144,128]{1,0:T(1,128)}', space=vmem, size = 0x12000, scoped, tag = 'internal scratch']
  #allocation2 [shape = 'f32[8,128]{1,0:T(8,128)}', space=vmem, size = 0x1000, scoped, tag = 'scratch operand']
  %s0 = inlined_call_operand.vmem [shape: f32[8,4], index: 0, kind: input, shape index: {}]
  %s1 = inlined_call_operand.hbm [shape: bf16[128,128], index: 1, kind: input, shape index: {}]
  %s2 = inlined_call_operand.vmem [shape: f32[1,128], index: 2, kind: input, shape index: {}]
  %s3 = inlined_call_operand.hbm [shape: bf16[128,128], index: 3, kind: input, shape index: {}]
  %s4 = inlined_call_operand.vmem [shape: f32[1,128], index: 4, kind: input, shape index: {}]
  %s5 = inlined_call_operand.hbm [shape: bf16[128,128], index: 5, kind: input, shape index: {}]
  %s6 = inlined_call_operand.vmem [shape: f32[1,128], index: 6, kind: input, shape index: {}]
  %s7 = inlined_call_operand.vmem [shape: f32[8,128], index: 7, kind: output, shape index: {}]
  %s8 = sld [smem:[#allocation0]]
  $region50: #{policy_network_forward.1} parent=0
    _
  %s10 = ssub.s32 1, %s8
  %s11 = scalar_select 0, %s10, %s8
  $region1: #{policy_network_forward.1} parent=0
    #allocation3 [shape = 'u8[32768]{0}', space=vmem, size = 0x8000, scoped, tag = 'input window, operand 1, single buffered']
    #allocation4 [shape = 's32[1]{0}', space=sflag, size = 0x4, scoped, tag = 'scoped memory for policy_network_forward.1']
    #allocation5 [shape = 'u8[32768]{0}', space=vmem, size = 0x8000, scoped, tag = 'input window, operand 3, single buffered']
    #allocation6 [shape = 's32[1]{0}', space=sflag, size = 0x4, scoped, tag = 'scoped memory for policy_network_forward.1']
    #allocation7 [shape = 'u8[32768]{0}', space=vmem, size = 0x8000, scoped, tag = 'input window, operand 5, single buffered']
    %12 = vsyncpa [#allocation4], 0
    %13 = vsyncpa [#allocation6], 0
    // Predicated region
    $region2: #{policy_network_forward.1} parent=1 // pred_check
      _
    $region3: #{policy_network_forward.1} parent=1 // pred_check_branch
      %15 = sbr.rel (0) target = $region5
    $region4: #{policy_network_forward.1} parent=1 // pred_region
      _
    $region5: #{policy_network_forward.1} parent=1 // pred_fallthru
      _
    // Predicated region
    $region6: #{policy_network_forward.1} parent=1 // pred_check
      _
    $region7: #{policy_network_forward.1} parent=1 // pred_check_branch
      %17 = sbr.rel (0) target = $region9
    $region8: #{policy_network_forward.1} parent=1 // pred_region
      %s19 = ssub.s32 1024, 1024
      %20 = vsyncadd [#allocation4], %s19
      %s21 = sshll.u32 [#allocation3], 4
      %s22 = int_to_ptr.vmem [resolvable:$true] %s21
      %27 = dma.hbm_to_vmem [thread:$0]  %s1, 1024, %s22, [#allocation4], 64, 64, 4
    $region9: #{policy_network_forward.1} parent=1 // pred_fallthru
      _
    // Predicated region
    $region10: #{policy_network_forward.1} parent=1 // pred_check
      _
    $region11: #{policy_network_forward.1} parent=1 // pred_check_branch
      %29 = sbr.rel (0) target = $region13
    $region12: #{policy_network_forward.1} parent=1 // pred_region
      _
    $region13: #{policy_network_forward.1} parent=1 // pred_fallthru
      _
    // Predicated region
    $region14: #{policy_network_forward.1} parent=1 // pred_check
      _
    $region15: #{policy_network_forward.1} parent=1 // pred_check_branch
      %31 = sbr.rel (0) target = $region17
    $region16: #{policy_network_forward.1} parent=1 // pred_region
      %s33 = ssub.s32 1024, 1024
      %34 = vsyncadd [#allocation6], %s33
      %s35 = sshll.u32 [#allocation5], 4
      %s36 = int_to_ptr.vmem [resolvable:$true] %s35
      %41 = dma.hbm_to_vmem [thread:$0]  %s3, 1024, %s36, [#allocation6], 64, 64, 4
    $region17: #{policy_network_forward.1} parent=1 // pred_fallthru
      _
    // Predicated region
    $region18: #{policy_network_forward.1} parent=1 // pred_check
      _
    $region19: #{policy_network_forward.1} parent=1 // pred_check_branch
      %43 = sbr.rel (0) target = $region21
    $region20: #{policy_network_forward.1} parent=1 // pred_region
      _
    $region21: #{policy_network_forward.1} parent=1 // pred_fallthru
      _
    // Predicated region
    $region22: #{policy_network_forward.1} parent=1 // pred_check
      _
    $region23: #{policy_network_forward.1} parent=1 // pred_check_branch
      %45 = sbr.rel (0) target = $region25
    $region24: #{policy_network_forward.1} parent=1 // pred_region
      %s47 = ssub.s32 1024, 1024
      %48 = vsyncadd [#allocation6], %s47
      %s49 = sshll.u32 [#allocation7], 4
      %s50 = int_to_ptr.vmem [resolvable:$true] %s49
      %55 = dma.hbm_to_vmem [thread:$0]  %s5, 1024, %s50, [#allocation6], 64, 64, 4
    $region25: #{policy_network_forward.1} parent=1 // pred_fallthru
      _
    // Predicated region
    $region26: #{policy_network_forward.1} parent=1 // pred_check
      _
    $region27: #{policy_network_forward.1} parent=1 // pred_check_branch
      %57 = sbr.rel (0) target = $region29
    $region28: #{policy_network_forward.1} parent=1 // pred_region
      _
    $region29: #{policy_network_forward.1} parent=1 // pred_fallthru
      _
    // Predicated region
    $region30: #{policy_network_forward.1} parent=1 // pred_check
      _
    $region31: #{policy_network_forward.1} parent=1 // pred_check_branch
      %59 = sbr.rel (0) target = $region33
    $region32: #{policy_network_forward.1} parent=1 // pred_region
      %60 = dma.done [#allocation4], 1024
    $region33: #{policy_network_forward.1} parent=1 // pred_fallthru
      _
    // Predicated region
    $region34: #{policy_network_forward.1} parent=1 // pred_check
      _
    $region35: #{policy_network_forward.1} parent=1 // pred_check_branch
      %62 = sbr.rel (0) target = $region37
    $region36: #{policy_network_forward.1} parent=1 // pred_region
      %63 = dma.done [#allocation6], 1024
    $region37: #{policy_network_forward.1} parent=1 // pred_fallthru
      _
    // Predicated region
    $region38: #{policy_network_forward.1} parent=1 // pred_check
      _
    $region39: #{policy_network_forward.1} parent=1 // pred_check_branch
      %65 = sbr.rel (0) target = $region41
    $region40: #{policy_network_forward.1} parent=1 // pred_region
      %66 = dma.done [#allocation6], 1024
    $region41: #{policy_network_forward.1} parent=1 // pred_fallthru
      _
    %68 = vst [vmem:[#allocation2] sm:$0xff] 0.0
    %v69 = vld [vmem:[%s0] sm:$0xff]
    %vm70 = vcmask 31744
    %71 = vst.msk [vmem:[#allocation2] sm:$0xff] %vm70, %v69
    %v72 = vld [vmem:[#allocation2] sm:$0xff]
    %v73 = vpack.c.bf16 %v72, %v72
    %v74 = vld [vmem:[#allocation3] sm:$0xf]
    %v75 = vld [vmem:[#allocation3 + $0x4] sm:$0xf]
    %v76 = vld [vmem:[#allocation3 + $0x8] sm:$0xf]
    %v77 = vld [vmem:[#allocation3 + $0xc] sm:$0xf]
    %v78 = vld [vmem:[#allocation3 + $0x10] sm:$0xf]
    %v79 = vld [vmem:[#allocation3 + $0x14] sm:$0xf]
    %v80 = vld [vmem:[#allocation3 + $0x18] sm:$0xf]
    %v81 = vld [vmem:[#allocation3 + $0x1c] sm:$0xf]
    %v82 = vld [vmem:[#allocation3 + $0x20] sm:$0xf]
    %v83 = vld [vmem:[#allocation3 + $0x24] sm:$0xf]
    %v84 = vld [vmem:[#allocation3 + $0x28] sm:$0xf]
    %v85 = vld [vmem:[#allocation3 + $0x2c] sm:$0xf]
    %v86 = vld [vmem:[#allocation3 + $0x30] sm:$0xf]
    %v87 = vld [vmem:[#allocation3 + $0x34] sm:$0xf]
    %v88 = vld [vmem:[#allocation3 + $0x38] sm:$0xf]
    %v89 = vld [vmem:[#allocation3 + $0x3c] sm:$0xf]
    %v90 = vld [vmem:[%s2] sm:$0x1]
    %v92 = vlaneseq
    %v93 = vshrl.u32 %v92, 7
    %v94 = vsub.s32 0, %v93
    %v95 = vrot.slane %v90, %v94
    %v113 = vunpack.c.l.b16 %v74
    %v114 = vunpack.c.l.b16 %v75
    %v115 = vunpack.c.l.b16 %v76
    %v116 = vunpack.c.l.b16 %v77
    %v117 = vunpack.c.l.b16 %v78
    %v118 = vunpack.c.l.b16 %v79
    %v119 = vunpack.c.l.b16 %v80
    %v120 = vunpack.c.l.b16 %v81
    %v121 = vunpack.c.l.b16 %v82
    %v122 = vunpack.c.l.b16 %v83
    %v123 = vunpack.c.l.b16 %v84
    %v124 = vunpack.c.l.b16 %v85
    %v125 = vunpack.c.l.b16 %v86
    %v126 = vunpack.c.l.b16 %v87
    %v127 = vunpack.c.l.b16 %v88
    %v128 = vunpack.c.l.b16 %v89
    %v129 = vpack.c.b16 %v114, %v113
    %v130 = vpack.c.b16 %v116, %v115
    %v131 = vpack.c.b16 %v118, %v117
    %v132 = vpack.c.b16 %v120, %v119
    %v133 = vpack.c.b16 %v122, %v121
    %v134 = vpack.c.b16 %v124, %v123
    %v135 = vpack.c.b16 %v126, %v125
    %v136 = vpack.c.b16 %v128, %v127
    %145 = vmatprep.subr.bf16.mxu0 0
    %146 = vmatpush1.bf16.msra.mxu0 %v136
    %147 = vmatprep.subr.bf16.mxu0 0
    %148 = vmatpush1.bf16.msra.mxu0 %v135
    %149 = vmatprep.subr.bf16.mxu0 0
    %150 = vmatpush1.bf16.msra.mxu0 %v134
    %151 = vmatprep.subr.bf16.mxu0 0
    %152 = vmatpush1.bf16.msra.mxu0 %v133
    %153 = vmatprep.subr.bf16.mxu0 0
    %154 = vmatpush1.bf16.msra.mxu0 %v132
    %155 = vmatprep.subr.bf16.mxu0 0
    %156 = vmatpush1.bf16.msra.mxu0 %v131
    %157 = vmatprep.subr.bf16.mxu0 0
    %158 = vmatpush1.bf16.msra.mxu0 %v130
    %159 = vmatprep.subr.bf16.mxu0 0
    %160 = vmatpush1.bf16.msra.mxu0 %v129
    %161 = vmatprep.subr.bf16.mxu0 0
    %162 = vmatpush2.bf16.msra.mxu0 0
    %163 = vmatprep.subr.bf16.mxu0 0
    %164 = vmatpush2.bf16.msra.mxu0 0
    %165 = vmatprep.subr.bf16.mxu0 0
    %166 = vmatpush2.bf16.msra.mxu0 0
    %167 = vmatprep.subr.bf16.mxu0 0
    %168 = vmatpush2.bf16.msra.mxu0 0
    %169 = vmatprep.subr.bf16.mxu0 0
    %170 = vmatpush2.bf16.msra.mxu0 0
    %171 = vmatprep.subr.bf16.mxu0 0
    %172 = vmatpush2.bf16.msra.mxu0 0
    %173 = vmatprep.subr.bf16.mxu0 0
    %174 = vmatpush2.bf16.msra.mxu0 0
    %175 = vmatprep.subr.bf16.mxu0 0
    %176 = vmatpush2.bf16.msra.mxu0 0
    %177 = vmatprep.mubr.bf16.mxu0 0
    %178 = vmatmul.mubr.bf16.gmra.mxu0 %v73
    %v179 = vpop.f32.mrf.mxu0
    %v180 = vadd.f32 %v95, %v179
    %v181 = vpop.f32.mrf.mxu0
    %v182 = vpop.f32.mrf.mxu0
    %v183 = vpop.f32.mrf.mxu0
    %184 = vdwg.mxu0
    %v185 = vmax.f32 %v180, 0.0
    %v186 = vpack.c.bf16 %v185, %v185
    %v187 = vld [vmem:[#allocation5] sm:$0xf]
    %v188 = vld [vmem:[#allocation5 + $0x4] sm:$0xf]
    %v189 = vld [vmem:[#allocation5 + $0x8] sm:$0xf]
    %v190 = vld [vmem:[#allocation5 + $0xc] sm:$0xf]
    %v191 = vld [vmem:[#allocation5 + $0x10] sm:$0xf]
    %v192 = vld [vmem:[#allocation5 + $0x14] sm:$0xf]
    %v193 = vld [vmem:[#allocation5 + $0x18] sm:$0xf]
    %v194 = vld [vmem:[#allocation5 + $0x1c] sm:$0xf]
    %v195 = vld [vmem:[#allocation5 + $0x20] sm:$0xf]
    %v196 = vld [vmem:[#allocation5 + $0x24] sm:$0xf]
    %v197 = vld [vmem:[#allocation5 + $0x28] sm:$0xf]
    %v198 = vld [vmem:[#allocation5 + $0x2c] sm:$0xf]
    %v199 = vld [vmem:[#allocation5 + $0x30] sm:$0xf]
    %v200 = vld [vmem:[#allocation5 + $0x34] sm:$0xf]
    %v201 = vld [vmem:[#allocation5 + $0x38] sm:$0xf]
    %v202 = vld [vmem:[#allocation5 + $0x3c] sm:$0xf]
    %v203 = vld [vmem:[%s4] sm:$0x1]
    %v205 = vlaneseq
    %v206 = vshrl.u32 %v205, 7
    %v207 = vsub.s32 0, %v206
    %v208 = vrot.slane %v203, %v207
    %v226 = vunpack.c.l.b16 %v187
    %v227 = vunpack.c.l.b16 %v188
    %v228 = vunpack.c.l.b16 %v189
    %v229 = vunpack.c.l.b16 %v190
    %v230 = vunpack.c.l.b16 %v191
    %v231 = vunpack.c.l.b16 %v192
    %v232 = vunpack.c.l.b16 %v193
    %v233 = vunpack.c.l.b16 %v194
    %v234 = vunpack.c.l.b16 %v195
    %v235 = vunpack.c.l.b16 %v196
    %v236 = vunpack.c.l.b16 %v197
    %v237 = vunpack.c.l.b16 %v198
    %v238 = vunpack.c.l.b16 %v199
    %v239 = vunpack.c.l.b16 %v200
    %v240 = vunpack.c.l.b16 %v201
    %v241 = vunpack.c.l.b16 %v202
    %v242 = vpack.c.b16 %v227, %v226
    %v243 = vpack.c.b16 %v229, %v228
    %v244 = vpack.c.b16 %v231, %v230
    %v245 = vpack.c.b16 %v233, %v232
    %v246 = vpack.c.b16 %v235, %v234
    %v247 = vpack.c.b16 %v237, %v236
    %v248 = vpack.c.b16 %v239, %v238
    %v249 = vpack.c.b16 %v241, %v240
    %258 = vmatprep.subr.bf16.mxu0 0
    %259 = vmatpush1.bf16.msra.mxu0 %v249
    %260 = vmatprep.subr.bf16.mxu0 0
    %261 = vmatpush1.bf16.msra.mxu0 %v248
    %262 = vmatprep.subr.bf16.mxu0 0
    %263 = vmatpush1.bf16.msra.mxu0 %v247
    %264 = vmatprep.subr.bf16.mxu0 0
    %265 = vmatpush1.bf16.msra.mxu0 %v246
    %266 = vmatprep.subr.bf16.mxu0 0
    %267 = vmatpush1.bf16.msra.mxu0 %v245
    %268 = vmatprep.subr.bf16.mxu0 0
    %269 = vmatpush1.bf16.msra.mxu0 %v244
    %270 = vmatprep.subr.bf16.mxu0 0
    %271 = vmatpush1.bf16.msra.mxu0 %v243
    %272 = vmatprep.subr.bf16.mxu0 0
    %273 = vmatpush1.bf16.msra.mxu0 %v242
    %274 = vmatprep.subr.bf16.mxu0 0
    %275 = vmatpush2.bf16.msra.mxu0 0
    %276 = vmatprep.subr.bf16.mxu0 0
    %277 = vmatpush2.bf16.msra.mxu0 0
    %278 = vmatprep.subr.bf16.mxu0 0
    %279 = vmatpush2.bf16.msra.mxu0 0
    %280 = vmatprep.subr.bf16.mxu0 0
    %281 = vmatpush2.bf16.msra.mxu0 0
    %282 = vmatprep.subr.bf16.mxu0 0
    %283 = vmatpush2.bf16.msra.mxu0 0
    %284 = vmatprep.subr.bf16.mxu0 0
    %285 = vmatpush2.bf16.msra.mxu0 0
    %286 = vmatprep.subr.bf16.mxu0 0
    %287 = vmatpush2.bf16.msra.mxu0 0
    %288 = vmatprep.subr.bf16.mxu0 0
    %289 = vmatpush2.bf16.msra.mxu0 0
    %290 = vmatprep.mubr.bf16.mxu0 0
    %291 = vmatmul.mubr.bf16.gmra.mxu0 %v186
    %v292 = vpop.f32.mrf.mxu0
    %v293 = vadd.f32 %v208, %v292
    %v294 = vpop.f32.mrf.mxu0
    %v295 = vpop.f32.mrf.mxu0
    %v296 = vpop.f32.mrf.mxu0
    %297 = vdwg.mxu0
    %v298 = vmax.f32 %v293, 0.0
    %v299 = vpack.c.bf16 %v298, %v298
    %v300 = vld [vmem:[#allocation7] sm:$0xf]
    %v301 = vld [vmem:[#allocation7 + $0x4] sm:$0xf]
    %v302 = vld [vmem:[#allocation7 + $0x8] sm:$0xf]
    %v303 = vld [vmem:[#allocation7 + $0xc] sm:$0xf]
    %v304 = vld [vmem:[#allocation7 + $0x10] sm:$0xf]
    %v305 = vld [vmem:[#allocation7 + $0x14] sm:$0xf]
    %v306 = vld [vmem:[#allocation7 + $0x18] sm:$0xf]
    %v307 = vld [vmem:[#allocation7 + $0x1c] sm:$0xf]
    %v308 = vld [vmem:[#allocation7 + $0x20] sm:$0xf]
    %v309 = vld [vmem:[#allocation7 + $0x24] sm:$0xf]
    %v310 = vld [vmem:[#allocation7 + $0x28] sm:$0xf]
    %v311 = vld [vmem:[#allocation7 + $0x2c] sm:$0xf]
    %v312 = vld [vmem:[#allocation7 + $0x30] sm:$0xf]
    %v313 = vld [vmem:[#allocation7 + $0x34] sm:$0xf]
    %v314 = vld [vmem:[#allocation7 + $0x38] sm:$0xf]
    %v315 = vld [vmem:[#allocation7 + $0x3c] sm:$0xf]
    %v316 = vld [vmem:[%s6] sm:$0x1]
    %v318 = vlaneseq
    %v319 = vshrl.u32 %v318, 7
    %v320 = vsub.s32 0, %v319
    %v321 = vrot.slane %v316, %v320
    %v339 = vunpack.c.l.b16 %v300
    %v340 = vunpack.c.l.b16 %v301
    %v341 = vunpack.c.l.b16 %v302
    %v342 = vunpack.c.l.b16 %v303
    %v343 = vunpack.c.l.b16 %v304
    %v344 = vunpack.c.l.b16 %v305
    %v345 = vunpack.c.l.b16 %v306
    %v346 = vunpack.c.l.b16 %v307
    %v347 = vunpack.c.l.b16 %v308
    %v348 = vunpack.c.l.b16 %v309
    %v349 = vunpack.c.l.b16 %v310
    %v350 = vunpack.c.l.b16 %v311
    %v351 = vunpack.c.l.b16 %v312
    %v352 = vunpack.c.l.b16 %v313
    %v353 = vunpack.c.l.b16 %v314
    %v354 = vunpack.c.l.b16 %v315
    %v355 = vpack.c.b16 %v340, %v339
    %v356 = vpack.c.b16 %v342, %v341
    %v357 = vpack.c.b16 %v344, %v343
    %v358 = vpack.c.b16 %v346, %v345
    %v359 = vpack.c.b16 %v348, %v347
    %v360 = vpack.c.b16 %v350, %v349
    %v361 = vpack.c.b16 %v352, %v351
    %v362 = vpack.c.b16 %v354, %v353
    %371 = vmatprep.subr.bf16.mxu0 0
    %372 = vmatpush1.bf16.msra.mxu0 %v362
    %373 = vmatprep.subr.bf16.mxu0 0
    %374 = vmatpush1.bf16.msra.mxu0 %v361
    %375 = vmatprep.subr.bf16.mxu0 0
    %376 = vmatpush1.bf16.msra.mxu0 %v360
    %377 = vmatprep.subr.bf16.mxu0 0
    %378 = vmatpush1.bf16.msra.mxu0 %v359
    %379 = vmatprep.subr.bf16.mxu0 0
    %380 = vmatpush1.bf16.msra.mxu0 %v358
    %381 = vmatprep.subr.bf16.mxu0 0
    %382 = vmatpush1.bf16.msra.mxu0 %v357
    %383 = vmatprep.subr.bf16.mxu0 0
    %384 = vmatpush1.bf16.msra.mxu0 %v356
    %385 = vmatprep.subr.bf16.mxu0 0
    %386 = vmatpush1.bf16.msra.mxu0 %v355
    %387 = vmatprep.subr.bf16.mxu0 0
    %388 = vmatpush2.bf16.msra.mxu0 0
    %389 = vmatprep.subr.bf16.mxu0 0
    %390 = vmatpush2.bf16.msra.mxu0 0
    %391 = vmatprep.subr.bf16.mxu0 0
    %392 = vmatpush2.bf16.msra.mxu0 0
    %393 = vmatprep.subr.bf16.mxu0 0
    %394 = vmatpush2.bf16.msra.mxu0 0
    %395 = vmatprep.subr.bf16.mxu0 0
    %396 = vmatpush2.bf16.msra.mxu0 0
    %397 = vmatprep.subr.bf16.mxu0 0
    %398 = vmatpush2.bf16.msra.mxu0 0
    %399 = vmatprep.subr.bf16.mxu0 0
    %400 = vmatpush2.bf16.msra.mxu0 0
    %401 = vmatprep.subr.bf16.mxu0 0
    %402 = vmatpush2.bf16.msra.mxu0 0
    %403 = vmatprep.mubr.bf16.mxu0 0
    %404 = vmatmul.mubr.bf16.gmra.mxu0 %v299
    %v405 = vpop.f32.mrf.mxu0
    %v406 = vadd.f32 %v321, %v405
    %v407 = vpop.f32.mrf.mxu0
    %v408 = vpop.f32.mrf.mxu0
    %v409 = vpop.f32.mrf.mxu0
    %410 = vdwg.mxu0
    %v411 = vlaneseq
    %v412 = vand.u32 %v411, 127
    %vm413 = vcmp.lt.s32.totalorder %v412, 2
    %v414 = vsel %vm413, %v406, -inf
    %415 = vmax.xlane.f32.xlu0 %v414
    %v416 = vpop.xlane.xlu0 %415
    %v417 = vsub.f32 %v414, %v416
    %v418 = vmul.f32 %v417, 1.442695
    %v419 = vpow.pop %v418
    %420 = vadd.xlane.f32.xlu0 %v419
    %v421 = vpop.xlane.xlu0 %420
    %v422 = vrcp.pop %v421
    %v423 = vmul.f32 %v419, %v422
    %424 = vst [vmem:[%s7] sm:$0xff] %v423
    // Predicated region
    $region42: #{policy_network_forward.1} parent=1 // pred_check
      _
    $region43: #{policy_network_forward.1} parent=1 // pred_check_branch
      %426 = sbr.rel (0) target = $region45
    $region44: #{policy_network_forward.1} parent=1 // pred_region
      _
    $region45: #{policy_network_forward.1} parent=1 // pred_fallthru
      _
    // Predicated region
    $region46: #{policy_network_forward.1} parent=1 // pred_check
      _
    $region47: #{policy_network_forward.1} parent=1 // pred_check_branch
      %428 = sbr.rel (0) target = $region49
    $region48: #{policy_network_forward.1} parent=1 // pred_region
      _
    $region49: #{policy_network_forward.1} parent=1 // pred_fallthru
      _
    %429 = vsyncpa [#allocation4], 1
    %430 = vsyncpa [#allocation6], 1

</llo_original>
